<compile_context>
chip_gen: v6e
topology: v6e:2x2x1
jax: 0.10.0
libtpu: 0.0.40
codegen_flags: <defaults>
</compile_context>

<pallas_src>
import jax
import jax.numpy as jnp
from jax.experimental import pallas as pl
from jax.experimental.pallas import tpu as pltpu

_LANE = 128


def _round_up(n, m):
    return ((n + m - 1) // m) * m


def _cdiv(a, b):
    return (a + b - 1) // b


# -----------------------------------------------------------------------------
# Kernels
# -----------------------------------------------------------------------------
def _mlp_kernel_resident(x_ref, w1_ref, b1_ref, w2_ref, b2_ref, o_ref):
    """Weights fully VMEM-resident; grid = (batch tiles,)."""
    x = x_ref[...]
    if x.dtype != w1_ref.dtype:              # static dtype check at trace time
        x = x.astype(w1_ref.dtype)
    h = jnp.dot(x, w1_ref[...], preferred_element_type=jnp.float32)
    h = jnp.maximum(h + b1_ref[...], 0.0)    # bias + ReLU in f32
    # Dropout(drop_p) in eval/inference mode == identity.
    out = jnp.dot(h.astype(w2_ref.dtype), w2_ref[...],
                  preferred_element_type=jnp.float32)
    o_ref[...] = (out + b2_ref[...]).astype(o_ref.dtype)


def _mlp_kernel_tiled(x_ref, w1_ref, b1_ref, w2_ref, b2_ref, o_ref, acc_ref):
    """Hidden dimension tiled; grid = (batch tiles, hidden tiles)."""
    k = pl.program_id(1)

    @pl.when(k == 0)
    def _():
        # Fold the output bias into the accumulator init (saves a finalize add).
        acc_ref[...] = jnp.broadcast_to(b2_ref[...], acc_ref.shape)

    x = x_ref[...]
    if x.dtype != w1_ref.dtype:
        x = x.astype(w1_ref.dtype)
    h = jnp.dot(x, w1_ref[...], preferred_element_type=jnp.float32)
    h = jnp.maximum(h + b1_ref[...], 0.0)
    # Dropout(drop_p) in eval/inference mode == identity.
    acc_ref[...] += jnp.dot(h.astype(w2_ref.dtype), w2_ref[...],
                            preferred_element_type=jnp.float32)

    @pl.when(k == pl.num_programs(1) - 1)
    def _():
        o_ref[...] = acc_ref[...].astype(o_ref.dtype)


# -----------------------------------------------------------------------------
# Parameter preparation (one-time; do NOT call per forward pass)
# -----------------------------------------------------------------------------
def prepare_params(w1, b1, w2, b2, compute_dtype=jnp.bfloat16):
    """w1: (hidden, in) torch layout; w2: (out, hidden) torch layout.

    Transposes to (in, out) layout and zero-pads every feature dim to a lane
    multiple so all matmuls / stores are lane-dense.  `hidden` is padded to a
    256 multiple when > 128 (MXU-friendly on v6e/v7x).  Biases stay f32 (added
    to the f32 accumulator inside the kernel).  Zero padding is numerically
    exact: padded rows/cols contribute 0 to every dot product; padded batch
    rows produce garbage that is sliced off outside the kernel.

    The PyTorch `fast_weights` path is this same forward with different
    weights: call prepare_params on the fast weights and reuse mlp_forward.
    """
    hidden, in_features = w1.shape
    out_features = w2.shape[0]
    in_p = _round_up(in_features, _LANE)
    hid_align = _LANE if hidden <= _LANE else 2 * _LANE
    hid_p = _round_up(hidden, hid_align)
    out_p = _round_up(out_features, _LANE)

    w1_t = jnp.zeros((in_p, hid_p), compute_dtype)
    w1_t = w1_t.at[:in_features, :hidden].set(jnp.asarray(w1, compute_dtype).T)
    w2_t = jnp.zeros((hid_p, out_p), compute_dtype)
    w2_t = w2_t.at[:hidden, :out_features].set(jnp.asarray(w2, compute_dtype).T)
    b1_r = jnp.zeros((1, hid_p), jnp.float32)
    b1_r = b1_r.at[0, :hidden].set(jnp.asarray(b1, jnp.float32))
    b2_r = jnp.zeros((1, out_p), jnp.float32)
    b2_r = b2_r.at[0, :out_features].set(jnp.asarray(b2, jnp.float32))

    return dict(w1=w1_t, b1=b1_r, w2=w2_t, b2=b2_r,
                in_features=in_features, hidden=hidden,
                out_features=out_features)


# -----------------------------------------------------------------------------
# Forward
# -----------------------------------------------------------------------------
def _vmem_budget_bytes():
    """Generation-aware usable-VMEM budget (~0.8x capacity, safe fallback)."""
    cap = 0
    try:
        cap = int(getattr(pltpu.get_tpu_info(), "vmem_capacity_bytes", 0))
    except Exception:
        cap = 0
    if cap <= 0:
        cap = 64 * 1024 * 1024        # conservative: fits every generation
    return min(int(cap * 0.8), 112 * 1024 * 1024)


def _maybe_pad_x(x, B, in_features, b_p, in_p, compute_dtype):
    """Skip the extra HBM round-trip when the input is already aligned; the
    kernel downcasts the x tile on the VPU if its dtype differs."""
    if b_p == B and in_p == in_features:
        return x
    x_pad = jnp.zeros((b_p, in_p), compute_dtype)
    return x_pad.at[:B, :in_features].set(x.astype(compute_dtype))


def mlp_forward(x, params, *, block_m=None, block_h=512):
    """x: (B, in_features).  params: output of prepare_params."""
    B, in_features = x.shape
    assert in_features == params["in_features"]
    w1, b1, w2, b2 = params["w1"], params["b1"], params["w2"], params["b2"]
    in_p, hid_p = w1.shape
    out_p = w2.shape[1]
    out_features = params["out_features"]
    compute_dtype = w1.dtype
    out_dtype = x.dtype

    w_item = jnp.dtype(compute_dtype).itemsize
    x_item = jnp.dtype(x.dtype).itemsize
    o_item = jnp.dtype(out_dtype).itemsize

    # Sublane packing: bf16 packs 2 rows per sublane, 1-byte dtypes pack 4.
    row_align = {4: 8, 2: 16, 1: 32}.get(w_item, 8)

    vmem_budget = _vmem_budget_bytes()

    # ---- batch (M) tile ----------------------------------------------------
    if block_m is None:
        block_m = 1024 if w_item <= 2 else 512
    b_al = _round_up(B, row_align)
    block_m = max(row_align, min(_round_up(block_m, row_align), b_al))
    # Guarantee >= 2 M-tiles when the batch is large enough so the "parallel"
    # axis can shard across v7x's two TensorCores (harmless on v5e/v6e).
    if b_al >= 2 * _LANE:
        block_m = min(block_m, _round_up(_cdiv(b_al, 2), row_align))

    # ---- path selection: weights VMEM-resident vs hidden-tiled --------------
    def resident_bytes(bm):
        return (2 * bm * in_p * x_item              # x tile (double buffered)
                + 2 * in_p * hid_p * w_item         # W1 (resident)
                + 2 * hid_p * out_p * w_item        # W2 (resident)
                + 2 * (hid_p + out_p) * 4           # biases (f32)
                + 2 * bm * out_p * o_item           # out tile
                + bm * hid_p * (4 + w_item)         # h (f32) + its downcast copy
                + bm * out_p * 4)                   # f32 result of 2nd matmul

    bm_res = block_m
    while resident_bytes(bm_res) > vmem_budget and bm_res > 2 * row_align:
        bm_res = max(row_align, _round_up(bm_res // 2, row_align))
    use_resident = resident_bytes(bm_res) <= vmem_budget

    if use_resident:
        block_m = bm_res
        b_p = _round_up(B, block_m)
        x_in = _maybe_pad_x(x, B, in_features, b_p, in_p, compute_dtype)
        grid = (b_p // block_m,)
        vmem_needed = resident_bytes(block_m)
        kernel = _mlp_kernel_resident
        in_specs = [
            pl.BlockSpec((block_m, in_p), lambda i: (i, 0)),
            pl.BlockSpec((in_p, hid_p), lambda i: (0, 0)),
            pl.BlockSpec((1, hid_p), lambda i: (0, 0)),
            pl.BlockSpec((hid_p, out_p), lambda i: (0, 0)),
            pl.BlockSpec((1, out_p), lambda i: (0, 0)),
        ]
        out_specs = pl.BlockSpec((block_m, out_p), lambda i: (i, 0))
        scratch_shapes = ()
        dim_sem = ("parallel",)
    else:
        # hidden tile: a multiple of 256 (128 fallback) that divides hid_p.
        step = 2 * _LANE if hid_p % (2 * _LANE) == 0 else _LANE
        block_h = max(step, (min(block_h, hid_p) // step) * step)
        while hid_p % block_h:
            block_h -= step

        def tiled_bytes(bm, bh):
            return (2 * bm * in_p * x_item
                    + 2 * in_p * bh * w_item
                    + 2 * bh * out_p * w_item
                    + 2 * (bh + out_p) * 4
                    + 2 * bm * out_p * o_item
                    + bm * out_p * 4                # f32 accumulator scratch
                    + bm * bh * (4 + w_item)        # h + downcast copy
                    + bm * out_p * 4)               # 2nd matmul f32 result

        while tiled_bytes(block_m, block_h) > vmem_budget and block_m > 2 * row_align:
            block_m = max(row_align, _round_up(block_m // 2, row_align))

        b_p = _round_up(B, block_m)
        x_in = _maybe_pad_x(x, B, in_features, b_p, in_p, compute_dtype)
        grid = (b_p // block_m, hid_p // block_h)
        vmem_needed = tiled_bytes(block_m, block_h)
        kernel = _mlp_kernel_tiled
        in_specs = [
            pl.BlockSpec((block_m, in_p), lambda i, k: (i, 0)),
            pl.BlockSpec((in_p, block_h), lambda i, k: (0, k)),
            pl.BlockSpec((1, block_h), lambda i, k: (0, k)),
            pl.BlockSpec((block_h, out_p), lambda i, k: (k, 0)),
            pl.BlockSpec((1, out_p), lambda i, k: (0, 0)),
        ]
        out_specs = pl.BlockSpec((block_m, out_p), lambda i, k: (i, 0))
        scratch_shapes = (pltpu.VMEM((block_m, out_p), jnp.float32),)
        dim_sem = ("parallel", "arbitrary")

    vmem_limit = int(min(112 * 1024 * 1024,
                         max(vmem_budget, (vmem_needed * 5) // 4,
                             16 * 1024 * 1024)))

    cost = pl.CostEstimate(
        flops=int(2 * b_p * (in_p * hid_p + hid_p * out_p)),
        transcendentals=0,
        bytes_accessed=int(x_in.size * jnp.dtype(x_in.dtype).itemsize
                           + w1.size * w_item + w2.size * w_item
                           + (b1.size + b2.size) * 4
                           + b_p * out_p * o_item),
    )

    out_padded = pl.pallas_call(
        kernel,
        out_shape=jax.ShapeDtypeStruct((b_p, out_p), out_dtype),
        grid_spec=pltpu.PrefetchScalarGridSpec(
            num_scalar_prefetch=0,
            grid=grid,
            in_specs=in_specs,
            out_specs=out_specs,
            scratch_shapes=scratch_shapes,
        ),
        compiler_params=pltpu.CompilerParams(
            dimension_semantics=dim_sem,
            vmem_limit_bytes=vmem_limit,
        ),
        cost_estimate=cost,
    )(x_in, w1, b1, w2, b2)

    if b_p != B or out_p != out_features:
        out_padded = out_padded[:B, :out_features]
    return out_padded


# -----------------------------------------------------------------------------
# Initialization mirroring the PyTorch module
# -----------------------------------------------------------------------------
def init_params(key, in_features, hidden_sizes, out_features):
    """kaiming_normal_(fan_in, relu) for weights, default nn.Linear bias init."""
    k1, k2, k3, k4 = jax.random.split(key, 4)
    w1 = jax.random.normal(k1, (hidden_sizes, in_features), jnp.float32) * jnp.sqrt(
        2.0 / in_features)
    w2 = jax.random.normal(k2, (out_features, hidden_sizes), jnp.float32) * jnp.sqrt(
        2.0 / hidden_sizes)
    b1 = jax.random.uniform(k3, (hidden_sizes,), jnp.float32,
                            -1.0 / jnp.sqrt(in_features), 1.0 / jnp.sqrt(in_features))
    b2 = jax.random.uniform(k4, (out_features,), jnp.float32,
                            -1.0 / jnp.sqrt(hidden_sizes), 1.0 / jnp.sqrt(hidden_sizes))
    return w1, b1, w2, b2


if __name__ == "__main__":
    # Shapes consistent with the module: mlp(in_features=16, out_features=8,
    # hidden_sizes=32, drop_p=0.1); inputs (batch, in_features).
    in_features, hidden_sizes, out_features = 16, 32, 8
    batch = 16

    key = jax.random.PRNGKey(0)
    kx, kp = jax.random.split(key)
    x = jax.random.normal(kx, (batch, in_features), jnp.float32)
    w1, b1, w2, b2 = init_params(kp, in_features, hidden_sizes, out_features)

    # One-time prep (transpose + pad); bf16 MXU compute by default.
    params = prepare_params(w1, b1, w2, b2)

    out = jax.block_until_ready(mlp_forward(x, params))

    # Same-precision reference (bf16 inputs, f32 accumulation) and full-f32 ref.
    cd = params["w1"].dtype
    h_ref = jnp.maximum(
        jnp.dot(x.astype(cd), jnp.asarray(w1, cd).T,
                preferred_element_type=jnp.float32) + b1, 0.0)
    ref_cd = jnp.dot(h_ref.astype(cd), jnp.asarray(w2, cd).T,
                     preferred_element_type=jnp.float32) + b2
    ref_f32 = jnp.maximum(x @ w1.T + b1, 0.0) @ w2.T + b2

    assert out.shape == (batch, out_features)
    assert jnp.allclose(out, ref_cd, atol=1e-2, rtol=1e-2)
    assert jnp.allclose(out, ref_f32, atol=1e-1, rtol=1e-1)

    print("KERNEL_OK")
</pallas_src>

<mosaic_0001>
module attributes {stable_mosaic.version = 11 : i64} {
  func.func @_mlp_kernel_resident(%arg0: i32, %arg1: memref<16x128xbf16, #tpu.memory_space<vmem>>, %arg2: memref<128x128xbf16, #tpu.memory_space<vmem>>, %arg3: memref<1x128xf32, #tpu.memory_space<vmem>>, %arg4: memref<128x128xbf16, #tpu.memory_space<vmem>>, %arg5: memref<1x128xf32, #tpu.memory_space<vmem>>, %arg6: memref<16x128xf32, #tpu.memory_space<vmem>>) attributes {dimension_semantics = [#tpu.dimension_semantics<parallel>], iteration_bounds = array<i64: 1>, scalar_prefetch = 0 : i64, scratch_operands = 0 : i64, tpu.core_type = #tpu.core_type<tc>, window_params = [{transform_indices = @transform_0, window_bounds = array<i64: 16, 128>}, {pipeline_mode = #tpu.pipeline_mode<synchronous>, transform_indices = @transform_1, window_bounds = array<i64: 128, 128>}, {pipeline_mode = #tpu.pipeline_mode<synchronous>, transform_indices = @transform_2, window_bounds = array<i64: 1, 128>}, {pipeline_mode = #tpu.pipeline_mode<synchronous>, transform_indices = @transform_3, window_bounds = array<i64: 128, 128>}, {pipeline_mode = #tpu.pipeline_mode<synchronous>, transform_indices = @transform_4, window_bounds = array<i64: 1, 128>}, {transform_indices = @transform_5, window_bounds = array<i64: 16, 128>}]} {
    %c0 = arith.constant 0 : index
    %c0_0 = arith.constant 0 : index
    %0 = vector.load %arg1[%c0, %c0_0] : memref<16x128xbf16, #tpu.memory_space<vmem>>, vector<16x128xbf16>
    %c0_1 = arith.constant 0 : index
    %c0_2 = arith.constant 0 : index
    %1 = vector.load %arg2[%c0_1, %c0_2] : memref<128x128xbf16, #tpu.memory_space<vmem>>, vector<128x128xbf16>
    %cst = arith.constant dense<0.000000e+00> : vector<16x128xf32>
    %2 = tpu.matmul %0, %1, %cst {dimension_numbers = #tpu.dot_dimension_numbers<[1], [0], [0], [1], [0, 0, 1, 1], [], []>} : vector<16x128xbf16>, vector<128x128xbf16>, vector<16x128xf32> -> vector<16x128xf32>
    %c0_3 = arith.constant 0 : index
    %c0_4 = arith.constant 0 : index
    %3 = vector.load %arg3[%c0_3, %c0_4] : memref<1x128xf32, #tpu.memory_space<vmem>>, vector<1x128xf32>
    %4 = vector.broadcast %3 : vector<1x128xf32> to vector<16x128xf32>
    %5 = arith.addf %2, %4 : vector<16x128xf32>
    %cst_5 = arith.constant 0.000000e+00 : f32
    %6 = vector.broadcast %cst_5 : f32 to vector<16x128xf32>
    %7 = arith.maximumf %5, %6 : vector<16x128xf32>
    %8 = arith.truncf %7 : vector<16x128xf32> to vector<16x128xbf16>
    %c0_6 = arith.constant 0 : index
    %c0_7 = arith.constant 0 : index
    %9 = vector.load %arg4[%c0_6, %c0_7] : memref<128x128xbf16, #tpu.memory_space<vmem>>, vector<128x128xbf16>
    %cst_8 = arith.constant dense<0.000000e+00> : vector<16x128xf32>
    %10 = tpu.matmul %8, %9, %cst_8 {dimension_numbers = #tpu.dot_dimension_numbers<[1], [0], [0], [1], [0, 0, 1, 1], [], []>} : vector<16x128xbf16>, vector<128x128xbf16>, vector<16x128xf32> -> vector<16x128xf32>
    %c0_9 = arith.constant 0 : index
    %c0_10 = arith.constant 0 : index
    %11 = vector.load %arg5[%c0_9, %c0_10] : memref<1x128xf32, #tpu.memory_space<vmem>>, vector<1x128xf32>
    %12 = vector.broadcast %11 : vector<1x128xf32> to vector<16x128xf32>
    %13 = arith.addf %10, %12 : vector<16x128xf32>
    %c0_11 = arith.constant 0 : index
    %c0_12 = arith.constant 0 : index
    %14 = vector.load %arg6[%c0_11, %c0_12] : memref<16x128xf32, #tpu.memory_space<vmem>>, vector<16x128xf32>
    tpu.vector_store %arg6[%c0_11, %c0_12], %13 {strides = array<i32>} : memref<16x128xf32, #tpu.memory_space<vmem>>, vector<16x128xf32>,
    return
  }
  func.func @transform_0(%arg0: i32) -> (i32, i32) {
    %c0_i32 = arith.constant 0 : i32
    %c0_i32_0 = arith.constant 0 : i32
    return %arg0, %c0_i32 : i32, i32
  }
  func.func @transform_1(%arg0: i32) -> (i32, i32) {
    %c0_i32 = arith.constant 0 : i32
    %c0_i32_0 = arith.constant 0 : i32
    %c0_i32_1 = arith.constant 0 : i32
    return %c0_i32, %c0_i32_0 : i32, i32
  }
  func.func @transform_2(%arg0: i32) -> (i32, i32) {
    %c0_i32 = arith.constant 0 : i32
    %c0_i32_0 = arith.constant 0 : i32
    %c0_i32_1 = arith.constant 0 : i32
    return %c0_i32, %c0_i32_0 : i32, i32
  }
  func.func @transform_3(%arg0: i32) -> (i32, i32) {
    %c0_i32 = arith.constant 0 : i32
    %c0_i32_0 = arith.constant 0 : i32
    %c0_i32_1 = arith.constant 0 : i32
    return %c0_i32, %c0_i32_0 : i32, i32
  }
  func.func @transform_4(%arg0: i32) -> (i32, i32) {
    %c0_i32 = arith.constant 0 : i32
    %c0_i32_0 = arith.constant 0 : i32
    %c0_i32_1 = arith.constant 0 : i32
    return %c0_i32, %c0_i32_0 : i32, i32
  }
  func.func @transform_5(%arg0: i32) -> (i32, i32) {
    %c0_i32 = arith.constant 0 : i32
    %c0_i32_0 = arith.constant 0 : i32
    return %arg0, %c0_i32 : i32, i32
  }
}

</mosaic_0001>

<llo_original>
// kernel: tpu_custom_call.1
$region0: #{tpu_custom_call.1}
  #allocation0 [shape = 'u32[]', space=smem, size = 0x4, offset = 0x4, fixed_abs, tag = 'smem constant byte address 0x4 - core index']
  #allocation1 [shape = 'u32[144,128]{1,0:T(1,128)}', space=vmem, size = 0x12000, scoped, tag = 'internal scratch']
  %s0 = inlined_call_operand.hbm [shape: bf16[16,128], index: 0, kind: input, shape index: {}]
  %s1 = inlined_call_operand.hbm [shape: bf16[128,128], index: 1, kind: input, shape index: {}]
  %s2 = inlined_call_operand.vmem [shape: f32[1,128], index: 2, kind: input, shape index: {}]
  %s3 = inlined_call_operand.hbm [shape: bf16[128,128], index: 3, kind: input, shape index: {}]
  %s4 = inlined_call_operand.vmem [shape: f32[1,128], index: 4, kind: input, shape index: {}]
  %s5 = inlined_call_operand.hbm [shape: f32[16,128], index: 5, kind: output, shape index: {}]
  %s6 = sld [smem:[#allocation0]]
  $region42: #{tpu_custom_call.1} parent=0
    _
  %s8 = ssub.s32 1, %s6
  %s9 = scalar_select 0, %s8, %s6
  $region1: #{tpu_custom_call.1} parent=0
    #allocation2 [shape = 'u8[4096]{0}', space=vmem, size = 0x1000, scoped, tag = 'input window, operand 0, single buffered']
    #allocation3 [shape = 's32[1]{0}', space=sflag, size = 0x4, scoped, tag = 'scoped memory for tpu_custom_call.1']
    #allocation4 [shape = 's32[1]{0}', space=sflag, size = 0x4, scoped, tag = 'scoped memory for tpu_custom_call.1']
    #allocation5 [shape = 'u8[32768]{0}', space=vmem, size = 0x8000, scoped, tag = 'input window, operand 1, single buffered']
    #allocation6 [shape = 's32[1]{0}', space=sflag, size = 0x4, scoped, tag = 'scoped memory for tpu_custom_call.1']
    #allocation7 [shape = 'u8[32768]{0}', space=vmem, size = 0x8000, scoped, tag = 'input window, operand 3, single buffered']
    #allocation8 [shape = 'u8[8192]{0}', space=vmem, size = 0x2000, scoped, tag = 'output window, operand 0, single buffered']
    %10 = vsyncpa [#allocation3], 0
    %11 = vsyncpa [#allocation6], 0
    %12 = vsyncpa [#allocation4], 0
    // Predicated region
    $region2: #{tpu_custom_call.1} parent=1 // pred_check
      _
    $region3: #{tpu_custom_call.1} parent=1 // pred_check_branch
      %14 = sbr.rel (0) target = $region5
    $region4: #{tpu_custom_call.1} parent=1 // pred_region
      %s16 = ssub.s32 128, 128
      %17 = vsyncadd [#allocation3], %s16
      %s18 = sshll.u32 [#allocation2], 4
      %s19 = int_to_ptr.vmem [resolvable:$true] %s18
      %24 = dma.hbm_to_vmem [thread:$0]  %s0, 128, %s19, [#allocation3], 64, 64, 4
    $region5: #{tpu_custom_call.1} parent=1 // pred_fallthru
      _
    // Predicated region
    $region6: #{tpu_custom_call.1} parent=1 // pred_check
      _
    $region7: #{tpu_custom_call.1} parent=1 // pred_check_branch
      %26 = sbr.rel (0) target = $region9
    $region8: #{tpu_custom_call.1} parent=1 // pred_region
      %s28 = ssub.s32 1024, 1024
      %29 = vsyncadd [#allocation6], %s28
      %s30 = sshll.u32 [#allocation5], 4
      %s31 = int_to_ptr.vmem [resolvable:$true] %s30
      %36 = dma.hbm_to_vmem [thread:$0]  %s1, 1024, %s31, [#allocation6], 64, 64, 4
    $region9: #{tpu_custom_call.1} parent=1 // pred_fallthru
      _
    // Predicated region
    $region10: #{tpu_custom_call.1} parent=1 // pred_check
      _
    $region11: #{tpu_custom_call.1} parent=1 // pred_check_branch
      %38 = sbr.rel (0) target = $region13
    $region12: #{tpu_custom_call.1} parent=1 // pred_region
      _
    $region13: #{tpu_custom_call.1} parent=1 // pred_fallthru
      _
    // Predicated region
    $region14: #{tpu_custom_call.1} parent=1 // pred_check
      _
    $region15: #{tpu_custom_call.1} parent=1 // pred_check_branch
      %40 = sbr.rel (0) target = $region17
    $region16: #{tpu_custom_call.1} parent=1 // pred_region
      %s42 = ssub.s32 1024, 1024
      %43 = vsyncadd [#allocation6], %s42
      %s44 = sshll.u32 [#allocation7], 4
      %s45 = int_to_ptr.vmem [resolvable:$true] %s44
      %50 = dma.hbm_to_vmem [thread:$0]  %s3, 1024, %s45, [#allocation6], 64, 64, 4
    $region17: #{tpu_custom_call.1} parent=1 // pred_fallthru
      _
    // Predicated region
    $region18: #{tpu_custom_call.1} parent=1 // pred_check
      _
    $region19: #{tpu_custom_call.1} parent=1 // pred_check_branch
      %52 = sbr.rel (0) target = $region21
    $region20: #{tpu_custom_call.1} parent=1 // pred_region
      _
    $region21: #{tpu_custom_call.1} parent=1 // pred_fallthru
      _
    // Predicated region
    $region22: #{tpu_custom_call.1} parent=1 // pred_check
      _
    $region23: #{tpu_custom_call.1} parent=1 // pred_check_branch
      %54 = sbr.rel (0) target = $region25
    $region24: #{tpu_custom_call.1} parent=1 // pred_region
      %55 = dma.done [#allocation3], 128
    $region25: #{tpu_custom_call.1} parent=1 // pred_fallthru
      _
    // Predicated region
    $region26: #{tpu_custom_call.1} parent=1 // pred_check
      _
    $region27: #{tpu_custom_call.1} parent=1 // pred_check_branch
      %57 = sbr.rel (0) target = $region29
    $region28: #{tpu_custom_call.1} parent=1 // pred_region
      %58 = dma.done [#allocation6], 1024
    $region29: #{tpu_custom_call.1} parent=1 // pred_fallthru
      _
    // Predicated region
    $region30: #{tpu_custom_call.1} parent=1 // pred_check
      _
    $region31: #{tpu_custom_call.1} parent=1 // pred_check_branch
      %60 = sbr.rel (0) target = $region33
    $region32: #{tpu_custom_call.1} parent=1 // pred_region
      %61 = dma.done [#allocation6], 1024
    $region33: #{tpu_custom_call.1} parent=1 // pred_fallthru
      _
    %v63 = vld [vmem:[#allocation2] sm:$0xf]
    %v64 = vld [vmem:[#allocation2 + $0x4] sm:$0xf]
    %v65 = vld [vmem:[#allocation5] sm:$0xf]
    %v66 = vld [vmem:[#allocation5 + $0x4] sm:$0xf]
    %v67 = vld [vmem:[#allocation5 + $0x8] sm:$0xf]
    %v68 = vld [vmem:[#allocation5 + $0xc] sm:$0xf]
    %v69 = vld [vmem:[#allocation5 + $0x10] sm:$0xf]
    %v70 = vld [vmem:[#allocation5 + $0x14] sm:$0xf]
    %v71 = vld [vmem:[#allocation5 + $0x18] sm:$0xf]
    %v72 = vld [vmem:[#allocation5 + $0x1c] sm:$0xf]
    %v73 = vld [vmem:[#allocation5 + $0x20] sm:$0xf]
    %v74 = vld [vmem:[#allocation5 + $0x24] sm:$0xf]
    %v75 = vld [vmem:[#allocation5 + $0x28] sm:$0xf]
    %v76 = vld [vmem:[#allocation5 + $0x2c] sm:$0xf]
    %v77 = vld [vmem:[#allocation5 + $0x30] sm:$0xf]
    %v78 = vld [vmem:[#allocation5 + $0x34] sm:$0xf]
    %v79 = vld [vmem:[#allocation5 + $0x38] sm:$0xf]
    %v80 = vld [vmem:[#allocation5 + $0x3c] sm:$0xf]
    %v81 = vld [vmem:[%s2] sm:$0x1]
    %v83 = vlaneseq
    %v84 = vshrl.u32 %v83, 7
    %v85 = vsub.s32 0, %v84
    %v86 = vrot.slane %v81, %v85
    %v90 = vunpack.c.l.b16 %v63
    %v91 = vunpack.c.l.b16 %v64
    %v92 = vpack.c.b16 %v91, %v90
    %v110 = vunpack.c.l.b16 %v65
    %v111 = vunpack.c.l.b16 %v66
    %v112 = vunpack.c.l.b16 %v67
    %v113 = vunpack.c.l.b16 %v68
    %v114 = vunpack.c.l.b16 %v69
    %v115 = vunpack.c.l.b16 %v70
    %v116 = vunpack.c.l.b16 %v71
    %v117 = vunpack.c.l.b16 %v72
    %v118 = vunpack.c.l.b16 %v73
    %v119 = vunpack.c.l.b16 %v74
    %v120 = vunpack.c.l.b16 %v75
    %v121 = vunpack.c.l.b16 %v76
    %v122 = vunpack.c.l.b16 %v77
    %v123 = vunpack.c.l.b16 %v78
    %v124 = vunpack.c.l.b16 %v79
    %v125 = vunpack.c.l.b16 %v80
    %v126 = vpack.c.b16 %v111, %v110
    %v127 = vpack.c.b16 %v113, %v112
    %v128 = vpack.c.b16 %v115, %v114
    %v129 = vpack.c.b16 %v117, %v116
    %v130 = vpack.c.b16 %v119, %v118
    %v131 = vpack.c.b16 %v121, %v120
    %v132 = vpack.c.b16 %v123, %v122
    %v133 = vpack.c.b16 %v125, %v124
    %142 = vmatprep.subr.bf16.mxu0 0
    %143 = vmatpush1.bf16.msra.mxu0 %v133
    %144 = vmatprep.subr.bf16.mxu0 0
    %145 = vmatpush1.bf16.msra.mxu0 %v132
    %146 = vmatprep.subr.bf16.mxu0 0
    %147 = vmatpush1.bf16.msra.mxu0 %v131
    %148 = vmatprep.subr.bf16.mxu0 0
    %149 = vmatpush1.bf16.msra.mxu0 %v130
    %150 = vmatprep.subr.bf16.mxu0 0
    %151 = vmatpush1.bf16.msra.mxu0 %v129
    %152 = vmatprep.subr.bf16.mxu0 0
    %153 = vmatpush1.bf16.msra.mxu0 %v128
    %154 = vmatprep.subr.bf16.mxu0 0
    %155 = vmatpush1.bf16.msra.mxu0 %v127
    %156 = vmatprep.subr.bf16.mxu0 0
    %157 = vmatpush1.bf16.msra.mxu0 %v126
    %158 = vmatprep.subr.bf16.mxu0 0
    %159 = vmatpush2.bf16.msra.mxu0 0
    %160 = vmatprep.subr.bf16.mxu0 0
    %161 = vmatpush2.bf16.msra.mxu0 0
    %162 = vmatprep.subr.bf16.mxu0 0
    %163 = vmatpush2.bf16.msra.mxu0 0
    %164 = vmatprep.subr.bf16.mxu0 0
    %165 = vmatpush2.bf16.msra.mxu0 0
    %166 = vmatprep.subr.bf16.mxu0 0
    %167 = vmatpush2.bf16.msra.mxu0 0
    %168 = vmatprep.subr.bf16.mxu0 0
    %169 = vmatpush2.bf16.msra.mxu0 0
    %170 = vmatprep.subr.bf16.mxu0 0
    %171 = vmatpush2.bf16.msra.mxu0 0
    %172 = vmatprep.subr.bf16.mxu0 0
    %173 = vmatpush2.bf16.msra.mxu0 0
    %174 = vmatprep.mubr.bf16.mxu0 0
    %175 = vmatmul.mubr.bf16.gmra.mxu0 %v92
    %v176 = vpop.f32.mrf.mxu0
    %v177 = vadd.f32 %v86, %v176
    %v178 = vpop.f32.mrf.mxu0
    %v179 = vpop.f32.mrf.mxu0
    %v180 = vadd.f32 %v86, %v179
    %v181 = vpop.f32.mrf.mxu0
    %182 = vdwg.mxu0
    %v183 = vmax.f32 %v177, 0.0
    %v184 = vmax.f32 %v180, 0.0
    %v185 = vpack.c.bf16 %v184, %v183
    %v186 = vld [vmem:[#allocation7] sm:$0xf]
    %v187 = vld [vmem:[#allocation7 + $0x4] sm:$0xf]
    %v188 = vld [vmem:[#allocation7 + $0x8] sm:$0xf]
    %v189 = vld [vmem:[#allocation7 + $0xc] sm:$0xf]
    %v190 = vld [vmem:[#allocation7 + $0x10] sm:$0xf]
    %v191 = vld [vmem:[#allocation7 + $0x14] sm:$0xf]
    %v192 = vld [vmem:[#allocation7 + $0x18] sm:$0xf]
    %v193 = vld [vmem:[#allocation7 + $0x1c] sm:$0xf]
    %v194 = vld [vmem:[#allocation7 + $0x20] sm:$0xf]
    %v195 = vld [vmem:[#allocation7 + $0x24] sm:$0xf]
    %v196 = vld [vmem:[#allocation7 + $0x28] sm:$0xf]
    %v197 = vld [vmem:[#allocation7 + $0x2c] sm:$0xf]
    %v198 = vld [vmem:[#allocation7 + $0x30] sm:$0xf]
    %v199 = vld [vmem:[#allocation7 + $0x34] sm:$0xf]
    %v200 = vld [vmem:[#allocation7 + $0x38] sm:$0xf]
    %v201 = vld [vmem:[#allocation7 + $0x3c] sm:$0xf]
    %v202 = vld [vmem:[%s4] sm:$0x1]
    %v204 = vlaneseq
    %v205 = vshrl.u32 %v204, 7
    %v206 = vsub.s32 0, %v205
    %v207 = vrot.slane %v202, %v206
    %v225 = vunpack.c.l.b16 %v186
    %v226 = vunpack.c.l.b16 %v187
    %v227 = vunpack.c.l.b16 %v188
    %v228 = vunpack.c.l.b16 %v189
    %v229 = vunpack.c.l.b16 %v190
    %v230 = vunpack.c.l.b16 %v191
    %v231 = vunpack.c.l.b16 %v192
    %v232 = vunpack.c.l.b16 %v193
    %v233 = vunpack.c.l.b16 %v194
    %v234 = vunpack.c.l.b16 %v195
    %v235 = vunpack.c.l.b16 %v196
    %v236 = vunpack.c.l.b16 %v197
    %v237 = vunpack.c.l.b16 %v198
    %v238 = vunpack.c.l.b16 %v199
    %v239 = vunpack.c.l.b16 %v200
    %v240 = vunpack.c.l.b16 %v201
    %v241 = vpack.c.b16 %v226, %v225
    %v242 = vpack.c.b16 %v228, %v227
    %v243 = vpack.c.b16 %v230, %v229
    %v244 = vpack.c.b16 %v232, %v231
    %v245 = vpack.c.b16 %v234, %v233
    %v246 = vpack.c.b16 %v236, %v235
    %v247 = vpack.c.b16 %v238, %v237
    %v248 = vpack.c.b16 %v240, %v239
    %257 = vmatprep.subr.bf16.mxu0 0
    %258 = vmatpush1.bf16.msra.mxu0 %v248
    %259 = vmatprep.subr.bf16.mxu0 0
    %260 = vmatpush1.bf16.msra.mxu0 %v247
    %261 = vmatprep.subr.bf16.mxu0 0
    %262 = vmatpush1.bf16.msra.mxu0 %v246
    %263 = vmatprep.subr.bf16.mxu0 0
    %264 = vmatpush1.bf16.msra.mxu0 %v245
    %265 = vmatprep.subr.bf16.mxu0 0
    %266 = vmatpush1.bf16.msra.mxu0 %v244
    %267 = vmatprep.subr.bf16.mxu0 0
    %268 = vmatpush1.bf16.msra.mxu0 %v243
    %269 = vmatprep.subr.bf16.mxu0 0
    %270 = vmatpush1.bf16.msra.mxu0 %v242
    %271 = vmatprep.subr.bf16.mxu0 0
    %272 = vmatpush1.bf16.msra.mxu0 %v241
    %273 = vmatprep.subr.bf16.mxu0 0
    %274 = vmatpush2.bf16.msra.mxu0 0
    %275 = vmatprep.subr.bf16.mxu0 0
    %276 = vmatpush2.bf16.msra.mxu0 0
    %277 = vmatprep.subr.bf16.mxu0 0
    %278 = vmatpush2.bf16.msra.mxu0 0
    %279 = vmatprep.subr.bf16.mxu0 0
    %280 = vmatpush2.bf16.msra.mxu0 0
    %281 = vmatprep.subr.bf16.mxu0 0
    %282 = vmatpush2.bf16.msra.mxu0 0
    %283 = vmatprep.subr.bf16.mxu0 0
    %284 = vmatpush2.bf16.msra.mxu0 0
    %285 = vmatprep.subr.bf16.mxu0 0
    %286 = vmatpush2.bf16.msra.mxu0 0
    %287 = vmatprep.subr.bf16.mxu0 0
    %288 = vmatpush2.bf16.msra.mxu0 0
    %289 = vmatprep.mubr.bf16.mxu0 0
    %290 = vmatmul.mubr.bf16.gmra.mxu0 %v185
    %v291 = vpop.f32.mrf.mxu0
    %v292 = vadd.f32 %v207, %v291
    %v293 = vpop.f32.mrf.mxu0
    %v294 = vpop.f32.mrf.mxu0
    %v295 = vadd.f32 %v207, %v294
    %v296 = vpop.f32.mrf.mxu0
    %297 = vdwg.mxu0
    %298 = vst [vmem:[#allocation8] sm:$0xff] %v292
    %299 = vst [vmem:[#allocation8 + $0x8] sm:$0xff] %v295
    // Predicated region
    $region34: #{tpu_custom_call.1} parent=1 // pred_check
      _
    $region35: #{tpu_custom_call.1} parent=1 // pred_check_branch
      %301 = sbr.rel (0) target = $region37
    $region36: #{tpu_custom_call.1} parent=1 // pred_region
      %s303 = ssub.s32 256, 256
      %304 = vsyncadd [#allocation4], %s303
      %s305 = sshll.u32 [#allocation8], 4
      %s306 = int_to_ptr.vmem [resolvable:$true] %s305
      %311 = dma.vmem_to_hbm [thread:$0]  %s306, 256, %s5, [#allocation4], 128, 128, 8
    $region37: #{tpu_custom_call.1} parent=1 // pred_fallthru
      _
    // Predicated region
    $region38: #{tpu_custom_call.1} parent=1 // pred_check
      _
    $region39: #{tpu_custom_call.1} parent=1 // pred_check_branch
      %313 = sbr.rel (0) target = $region41
    $region40: #{tpu_custom_call.1} parent=1 // pred_region
      %314 = dma.done [#allocation4], 256
    $region41: #{tpu_custom_call.1} parent=1 // pred_fallthru
      _
    %315 = vsyncpa [#allocation3], 1
    %316 = vsyncpa [#allocation6], 1
    %317 = vsyncpa [#allocation4], 1

</llo_original>
